<compile_context>
chip_gen: v6e
topology: v6e:2x2x1
jax: 0.10.0
libtpu: 0.0.40
codegen_flags: <defaults>
</compile_context>

<pallas_src>
import functools
import math

import jax
import jax.numpy as jnp
import numpy as np
from jax.experimental import pallas as pl
from jax.experimental.pallas import tpu as pltpu


def scaling_kernel(x_ref, scale_ref, y_ref, *, reverse):
    """y = x * exp(+/- scale), broadcast over the batch tile.

    x_ref     : (TB, Deff)  batch tile (streamed)
    scale_ref : (1,  Deff)  grid-invariant, VMEM-resident
    y_ref     : (TB, Deff)  output tile
    """
    s = scale_ref[...].astype(jnp.float32)
    if reverse:                          # static Python flag -> no runtime branch
        s = -s
    factor = jnp.exp(s)                  # (1, Deff) on the EUP, hidden under DMA
    y_ref[...] = (x_ref[...].astype(jnp.float32) * factor).astype(y_ref.dtype)


def scaling_forward(x, scale, reverse=False, *, block_b=4096,
                    max_tile_bytes=2 << 20):
    """Pallas forward of the Scaling module. Returns (y, log_det_J scalar)."""
    B, D = x.shape
    out_dtype = x.dtype
    scale2d = scale.reshape(1, D)

    # log|det J| = +/- sum(scale): O(D) work, computed in the wrapper.  This
    # removes the grid-invariant scalar output from the kernel, which is what
    # allows the batch grid axis to be "parallel" (dual-TensorCore on v7x).
    log_det = jnp.sum(scale2d.astype(jnp.float32))
    if reverse:
        log_det = -log_det

    # ---- lane-dense re-layout for small feature dims -----------------------
    # If D is not a multiple of 128, fold k batch rows into one row so the
    # last (lane) dim becomes lcm(D, 128): unmasked stores, no wasted lanes.
    k = 1
    if D % 128 != 0:
        k = 128 // math.gcd(D, 128)
    d_eff = k * D

    x_work = x
    if k > 1:
        pad_b = (-B) % k
        if pad_b:
            x_work = jnp.pad(x_work, ((0, pad_b), (0, 0)))
        x_work = x_work.reshape(-1, d_eff)
        scale_eff = jnp.tile(scale2d, (1, k))
    else:
        scale_eff = scale2d
    scale_eff = scale_eff.astype(jnp.float32)

    rows = x_work.shape[0]

    # ---- batch tile ---------------------------------------------------------
    # Target ~max_tile_bytes (2 MiB default) per tile: large enough to amortize
    # per-grid-step overhead on all generations, small enough that the
    # double-buffered input + output tiles fit the default scoped VMEM limit
    # everywhere (v5e 16 MiB, v6e/v7x 32 MiB).  For v7x tuning, pass a larger
    # block_b / max_tile_bytes and add vmem_limit_bytes to CompilerParams.
    bytes_per_row = d_eff * jnp.dtype(out_dtype).itemsize
    tb_cap = max(8, int(max_tile_bytes // bytes_per_row) // 8 * 8)
    tb = max(8, (min(block_b, tb_cap) // 8) * 8)
    if rows <= tb:
        tb = rows                        # single full-extent block is legal
    else:
        pad_r = (-rows) % tb             # pad the batch, keep the pipeline
        if pad_r:
            x_work = jnp.pad(x_work, ((0, pad_r), (0, 0)))
            rows += pad_r
    grid = (rows // tb,)

    cost = pl.CostEstimate(
        flops=rows * d_eff + grid[0] * d_eff,
        transcendentals=grid[0] * d_eff,
        bytes_accessed=2 * rows * bytes_per_row + d_eff * 4,
    )

    kernel = functools.partial(scaling_kernel, reverse=reverse)
    y_work = pl.pallas_call(
        kernel,
        out_shape=jax.ShapeDtypeStruct((rows, d_eff), out_dtype),
        grid_spec=pltpu.PrefetchScalarGridSpec(
            num_scalar_prefetch=0,
            grid=grid,
            in_specs=[
                pl.BlockSpec((tb, d_eff), lambda i: (i, 0)),   # x: streamed tiles
                pl.BlockSpec((1, d_eff), lambda i: (0, 0)),    # scale: resident
            ],
            out_specs=pl.BlockSpec((tb, d_eff), lambda i: (i, 0)),
        ),
        compiler_params=pltpu.CompilerParams(
            dimension_semantics=("parallel",)),
        cost_estimate=cost,
    )(x_work, scale_eff)

    # Undo padding / row folding.
    if k > 1:
        y = y_work.reshape(-1, D)[:B]
    else:
        y = y_work[:B]
    return y, log_det


def scaling_reference(x, scale, reverse=False):
    """Pure-JAX reference mirroring the PyTorch forward."""
    scale = scale.reshape(1, -1)
    if reverse:
        return x * jnp.exp(-scale), -jnp.sum(scale)
    return x * jnp.exp(scale), jnp.sum(scale)


if __name__ == "__main__":
    key = jax.random.PRNGKey(0)

    def check(B, dim, reverse):
        kx, ks = jax.random.split(jax.random.fold_in(key, 1000 * B + dim))
        x = jax.random.normal(kx, (B, dim), dtype=jnp.float32)
        # The module initializes `scale` to zeros; use a random "learned" value
        # so the test actually exercises the math (deterministic via PRNGKey).
        scale = 0.1 * jax.random.normal(ks, (1, dim), dtype=jnp.float32)

        f = jax.jit(functools.partial(scaling_forward, reverse=reverse))
        y, ld = jax.block_until_ready(f(x, scale))
        y_ref, ld_ref = scaling_reference(x, scale, reverse=reverse)
        np.testing.assert_allclose(np.asarray(y), np.asarray(y_ref),
                                   rtol=1e-4, atol=1e-4)
        np.testing.assert_allclose(float(np.asarray(ld)), float(ld_ref),
                                   rtol=1e-4, atol=1e-4)

    # Sampling and inference modes at the module's nominal shape.
    check(256, 128, reverse=False)
    check(256, 128, reverse=True)
    # Small feature dim -> lane folding (k=16) + batch padding.
    check(37, 8, reverse=False)
    check(37, 8, reverse=True)
    # Ragged larger batch -> padded to tile multiple, grid > 1, "parallel" axis.
    check(10000, 128, reverse=False)

    print("KERNEL_OK")
</pallas_src>

<mosaic_0001>
module attributes {stable_mosaic.version = 11 : i64} {
  func.func @scaling_kernel(%arg0: i32, %arg1: memref<256x128xf32, #tpu.memory_space<vmem>>, %arg2: memref<1x128xf32, #tpu.memory_space<vmem>>, %arg3: memref<256x128xf32, #tpu.memory_space<vmem>>) attributes {dimension_semantics = [#tpu.dimension_semantics<parallel>], iteration_bounds = array<i64: 1>, scalar_prefetch = 0 : i64, scratch_operands = 0 : i64, tpu.core_type = #tpu.core_type<tc>, window_params = [{transform_indices = @transform_0, window_bounds = array<i64: 256, 128>}, {pipeline_mode = #tpu.pipeline_mode<synchronous>, transform_indices = @transform_1, window_bounds = array<i64: 1, 128>}, {transform_indices = @transform_2, window_bounds = array<i64: 256, 128>}]} {
    %c0 = arith.constant 0 : index
    %c0_0 = arith.constant 0 : index
    %0 = vector.load %arg2[%c0, %c0_0] : memref<1x128xf32, #tpu.memory_space<vmem>>, vector<1x128xf32>
    %1 = math.exp %0 : vector<1x128xf32>
    %c0_1 = arith.constant 0 : index
    %c0_2 = arith.constant 0 : index
    %2 = vector.load %arg1[%c0_1, %c0_2] : memref<256x128xf32, #tpu.memory_space<vmem>>, vector<256x128xf32>
    %3 = vector.broadcast %1 : vector<1x128xf32> to vector<256x128xf32>
    %4 = arith.mulf %2, %3 : vector<256x128xf32>
    %c0_3 = arith.constant 0 : index
    %c0_4 = arith.constant 0 : index
    %5 = vector.load %arg3[%c0_3, %c0_4] : memref<256x128xf32, #tpu.memory_space<vmem>>, vector<256x128xf32>
    tpu.vector_store %arg3[%c0_3, %c0_4], %4 {strides = array<i32>} : memref<256x128xf32, #tpu.memory_space<vmem>>, vector<256x128xf32>,
    return
  }
  func.func @transform_0(%arg0: i32) -> (i32, i32) {
    %c0_i32 = arith.constant 0 : i32
    %c0_i32_0 = arith.constant 0 : i32
    return %arg0, %c0_i32 : i32, i32
  }
  func.func @transform_1(%arg0: i32) -> (i32, i32) {
    %c0_i32 = arith.constant 0 : i32
    %c0_i32_0 = arith.constant 0 : i32
    %c0_i32_1 = arith.constant 0 : i32
    return %c0_i32, %c0_i32_0 : i32, i32
  }
  func.func @transform_2(%arg0: i32) -> (i32, i32) {
    %c0_i32 = arith.constant 0 : i32
    %c0_i32_0 = arith.constant 0 : i32
    return %arg0, %c0_i32 : i32, i32
  }
}

</mosaic_0001>

<llo_original>
// kernel: scaling_forward.1
$region0: #{scaling_forward.1}
  #allocation0 [shape = 'u32[]', space=smem, size = 0x4, offset = 0x4, fixed_abs, tag = 'smem constant byte address 0x4 - core index']
  #allocation1 [shape = 'u32[144,128]{1,0:T(1,128)}', space=vmem, size = 0x12000, scoped, tag = 'internal scratch']
  %s0 = inlined_call_operand.hbm [shape: f32[256,128], index: 0, kind: input, shape index: {}]
  %s1 = inlined_call_operand.vmem [shape: f32[1,128], index: 1, kind: input, shape index: {}]
  %s2 = inlined_call_operand.hbm [shape: f32[256,128], index: 2, kind: output, shape index: {}]
  %s3 = sld [smem:[#allocation0]]
  $region22: #{scaling_forward.1} parent=0
    _
  %s5 = ssub.s32 1, %s3
  %s6 = scalar_select 0, %s5, %s3
  $region1: #{scaling_forward.1} parent=0
    #allocation2 [shape = 'u8[131072]{0}', space=vmem, size = 0x20000, scoped, tag = 'input window, operand 0, single buffered']
    #allocation3 [shape = 's32[1]{0}', space=sflag, size = 0x4, scoped, tag = 'scoped memory for scaling_forward.1']
    #allocation4 [shape = 's32[1]{0}', space=sflag, size = 0x4, scoped, tag = 'scoped memory for scaling_forward.1']
    #allocation5 [shape = 'u8[131072]{0}', space=vmem, size = 0x20000, scoped, tag = 'output window, operand 0, single buffered']
    %7 = vsyncpa [#allocation3], 0
    %8 = vsyncpa [#allocation4], 0
    // Predicated region
    $region2: #{scaling_forward.1} parent=1 // pred_check
      _
    $region3: #{scaling_forward.1} parent=1 // pred_check_branch
      %10 = sbr.rel (0) target = $region5
    $region4: #{scaling_forward.1} parent=1 // pred_region
      %s12 = ssub.s32 4096, 4096
      %13 = vsyncadd [#allocation3], %s12
      %s14 = sshll.u32 [#allocation2], 4
      %s15 = int_to_ptr.vmem [resolvable:$true] %s14
      %20 = dma.hbm_to_vmem [thread:$0]  %s0, 4096, %s15, [#allocation3], 128, 128, 8
    $region5: #{scaling_forward.1} parent=1 // pred_fallthru
      _
    // Predicated region
    $region6: #{scaling_forward.1} parent=1 // pred_check
      _
    $region7: #{scaling_forward.1} parent=1 // pred_check_branch
      %22 = sbr.rel (0) target = $region9
    $region8: #{scaling_forward.1} parent=1 // pred_region
      _
    $region9: #{scaling_forward.1} parent=1 // pred_fallthru
      _
    // Predicated region
    $region10: #{scaling_forward.1} parent=1 // pred_check
      _
    $region11: #{scaling_forward.1} parent=1 // pred_check_branch
      %24 = sbr.rel (0) target = $region13
    $region12: #{scaling_forward.1} parent=1 // pred_region
      %25 = dma.done [#allocation3], 4096
    $region13: #{scaling_forward.1} parent=1 // pred_fallthru
      _
    %v26 = vld [vmem:[%s1] sm:$0x1]
    %v27 = vmul.f32 %v26, 1.442695
    %v28 = vpow.pop %v27
    %v29 = vld [vmem:[#allocation2] sm:$0xff]
    %v30 = vld [vmem:[#allocation2 + $0x8] sm:$0xff]
    %v31 = vld [vmem:[#allocation2 + $0x10] sm:$0xff]
    %v32 = vld [vmem:[#allocation2 + $0x18] sm:$0xff]
    %v33 = vld [vmem:[#allocation2 + $0x20] sm:$0xff]
    %v34 = vld [vmem:[#allocation2 + $0x28] sm:$0xff]
    %v35 = vld [vmem:[#allocation2 + $0x30] sm:$0xff]
    %v36 = vld [vmem:[#allocation2 + $0x38] sm:$0xff]
    %v37 = vld [vmem:[#allocation2 + $0x40] sm:$0xff]
    %v38 = vld [vmem:[#allocation2 + $0x48] sm:$0xff]
    %v39 = vld [vmem:[#allocation2 + $0x50] sm:$0xff]
    %v40 = vld [vmem:[#allocation2 + $0x58] sm:$0xff]
    %v41 = vld [vmem:[#allocation2 + $0x60] sm:$0xff]
    %v42 = vld [vmem:[#allocation2 + $0x68] sm:$0xff]
    %v43 = vld [vmem:[#allocation2 + $0x70] sm:$0xff]
    %v44 = vld [vmem:[#allocation2 + $0x78] sm:$0xff]
    %v45 = vld [vmem:[#allocation2 + $0x80] sm:$0xff]
    %v46 = vld [vmem:[#allocation2 + $0x88] sm:$0xff]
    %v47 = vld [vmem:[#allocation2 + $0x90] sm:$0xff]
    %v48 = vld [vmem:[#allocation2 + $0x98] sm:$0xff]
    %v49 = vld [vmem:[#allocation2 + $0xa0] sm:$0xff]
    %v50 = vld [vmem:[#allocation2 + $0xa8] sm:$0xff]
    %v51 = vld [vmem:[#allocation2 + $0xb0] sm:$0xff]
    %v52 = vld [vmem:[#allocation2 + $0xb8] sm:$0xff]
    %v53 = vld [vmem:[#allocation2 + $0xc0] sm:$0xff]
    %v54 = vld [vmem:[#allocation2 + $0xc8] sm:$0xff]
    %v55 = vld [vmem:[#allocation2 + $0xd0] sm:$0xff]
    %v56 = vld [vmem:[#allocation2 + $0xd8] sm:$0xff]
    %v57 = vld [vmem:[#allocation2 + $0xe0] sm:$0xff]
    %v58 = vld [vmem:[#allocation2 + $0xe8] sm:$0xff]
    %v59 = vld [vmem:[#allocation2 + $0xf0] sm:$0xff]
    %v60 = vld [vmem:[#allocation2 + $0xf8] sm:$0xff]
    %v62 = vlaneseq
    %v63 = vshrl.u32 %v62, 7
    %v64 = vsub.s32 0, %v63
    %v65 = vrot.slane %v28, %v64
    %v67 = vmul.f32 %v29, %v65
    %v68 = vmul.f32 %v30, %v65
    %v69 = vmul.f32 %v31, %v65
    %v70 = vmul.f32 %v32, %v65
    %v71 = vmul.f32 %v33, %v65
    %v72 = vmul.f32 %v34, %v65
    %v73 = vmul.f32 %v35, %v65
    %v74 = vmul.f32 %v36, %v65
    %v75 = vmul.f32 %v37, %v65
    %v76 = vmul.f32 %v38, %v65
    %v77 = vmul.f32 %v39, %v65
    %v78 = vmul.f32 %v40, %v65
    %v79 = vmul.f32 %v41, %v65
    %v80 = vmul.f32 %v42, %v65
    %v81 = vmul.f32 %v43, %v65
    %v82 = vmul.f32 %v44, %v65
    %v83 = vmul.f32 %v45, %v65
    %v84 = vmul.f32 %v46, %v65
    %v85 = vmul.f32 %v47, %v65
    %v86 = vmul.f32 %v48, %v65
    %v87 = vmul.f32 %v49, %v65
    %v88 = vmul.f32 %v50, %v65
    %v89 = vmul.f32 %v51, %v65
    %v90 = vmul.f32 %v52, %v65
    %v91 = vmul.f32 %v53, %v65
    %v92 = vmul.f32 %v54, %v65
    %v93 = vmul.f32 %v55, %v65
    %v94 = vmul.f32 %v56, %v65
    %v95 = vmul.f32 %v57, %v65
    %v96 = vmul.f32 %v58, %v65
    %v97 = vmul.f32 %v59, %v65
    %v98 = vmul.f32 %v60, %v65
    %99 = vst [vmem:[#allocation5] sm:$0xff] %v67
    %100 = vst [vmem:[#allocation5 + $0x8] sm:$0xff] %v68
    %101 = vst [vmem:[#allocation5 + $0x10] sm:$0xff] %v69
    %102 = vst [vmem:[#allocation5 + $0x18] sm:$0xff] %v70
    %103 = vst [vmem:[#allocation5 + $0x20] sm:$0xff] %v71
    %104 = vst [vmem:[#allocation5 + $0x28] sm:$0xff] %v72
    %105 = vst [vmem:[#allocation5 + $0x30] sm:$0xff] %v73
    %106 = vst [vmem:[#allocation5 + $0x38] sm:$0xff] %v74
    %107 = vst [vmem:[#allocation5 + $0x40] sm:$0xff] %v75
    %108 = vst [vmem:[#allocation5 + $0x48] sm:$0xff] %v76
    %109 = vst [vmem:[#allocation5 + $0x50] sm:$0xff] %v77
    %110 = vst [vmem:[#allocation5 + $0x58] sm:$0xff] %v78
    %111 = vst [vmem:[#allocation5 + $0x60] sm:$0xff] %v79
    %112 = vst [vmem:[#allocation5 + $0x68] sm:$0xff] %v80
    %113 = vst [vmem:[#allocation5 + $0x70] sm:$0xff] %v81
    %114 = vst [vmem:[#allocation5 + $0x78] sm:$0xff] %v82
    %115 = vst [vmem:[#allocation5 + $0x80] sm:$0xff] %v83
    %116 = vst [vmem:[#allocation5 + $0x88] sm:$0xff] %v84
    %117 = vst [vmem:[#allocation5 + $0x90] sm:$0xff] %v85
    %118 = vst [vmem:[#allocation5 + $0x98] sm:$0xff] %v86
    %119 = vst [vmem:[#allocation5 + $0xa0] sm:$0xff] %v87
    %120 = vst [vmem:[#allocation5 + $0xa8] sm:$0xff] %v88
    %121 = vst [vmem:[#allocation5 + $0xb0] sm:$0xff] %v89
    %122 = vst [vmem:[#allocation5 + $0xb8] sm:$0xff] %v90
    %123 = vst [vmem:[#allocation5 + $0xc0] sm:$0xff] %v91
    %124 = vst [vmem:[#allocation5 + $0xc8] sm:$0xff] %v92
    %125 = vst [vmem:[#allocation5 + $0xd0] sm:$0xff] %v93
    %126 = vst [vmem:[#allocation5 + $0xd8] sm:$0xff] %v94
    %127 = vst [vmem:[#allocation5 + $0xe0] sm:$0xff] %v95
    %128 = vst [vmem:[#allocation5 + $0xe8] sm:$0xff] %v96
    %129 = vst [vmem:[#allocation5 + $0xf0] sm:$0xff] %v97
    %130 = vst [vmem:[#allocation5 + $0xf8] sm:$0xff] %v98
    // Predicated region
    $region14: #{scaling_forward.1} parent=1 // pred_check
      _
    $region15: #{scaling_forward.1} parent=1 // pred_check_branch
      %132 = sbr.rel (0) target = $region17
    $region16: #{scaling_forward.1} parent=1 // pred_region
      %s134 = ssub.s32 4096, 4096
      %135 = vsyncadd [#allocation4], %s134
      %s136 = sshll.u32 [#allocation5], 4
      %s137 = int_to_ptr.vmem [resolvable:$true] %s136
      %142 = dma.vmem_to_hbm [thread:$0]  %s137, 4096, %s2, [#allocation4], 128, 128, 8
    $region17: #{scaling_forward.1} parent=1 // pred_fallthru
      _
    // Predicated region
    $region18: #{scaling_forward.1} parent=1 // pred_check
      _
    $region19: #{scaling_forward.1} parent=1 // pred_check_branch
      %144 = sbr.rel (0) target = $region21
    $region20: #{scaling_forward.1} parent=1 // pred_region
      %145 = dma.done [#allocation4], 4096
    $region21: #{scaling_forward.1} parent=1 // pred_fallthru
      _
    %146 = vsyncpa [#allocation3], 1
    %147 = vsyncpa [#allocation4], 1

</llo_original>
